<compile_context>
chip_gen: v7x
topology: tpu7x:2x2x1
jax: 0.10.0
libtpu: 0.0.40
codegen_flags: <defaults>
</compile_context>

<pallas_src>
import functools

import jax
import jax.numpy as jnp
from jax.experimental import pallas as pl
from jax.experimental.pallas import tpu as pltpu


# ----------------------------------------------------------------------------
# Kernel
# ----------------------------------------------------------------------------
def _matmul_bias_kernel(x_ref, w_ref, b_ref, o_ref, acc_ref):
    k = pl.program_id(2)

    @pl.when(k == 0)
    def _():
        # Fold the (f32) bias into the accumulator init: broadcast (1, tn)
        # over (tm, tn).  Removes the extra VPU add from the epilogue step.
        acc_ref[...] = jnp.broadcast_to(b_ref[...], acc_ref.shape)

    acc_ref[...] += jnp.dot(
        x_ref[...], w_ref[...], preferred_element_type=jnp.float32
    )

    @pl.when(k == pl.num_programs(2) - 1)
    def _():
        o_ref[...] = acc_ref[...].astype(o_ref.dtype)


# ----------------------------------------------------------------------------
# Helpers
# ----------------------------------------------------------------------------
def _round_up(x, m):
    return (x + m - 1) // m * m


def _pick_tile(padded_ext, cap, align, prefer=None):
    """Largest tile <= cap that divides `padded_ext` and is a multiple of
    `align`.  If `prefer` is given (e.g. 256 for the v6e/v7x 2x256 MXU), try
    multiples of `prefer` first."""
    top = min(cap, padded_ext)
    if prefer is not None and prefer >= align and top >= prefer:
        t = (top // prefer) * prefer
        while t >= prefer:
            if padded_ext % t == 0:
                return t
            t -= prefer
    t = (top // align) * align
    while t >= align:
        if padded_ext % t == 0:
            return t
        t -= align
    return padded_ext  # padded_ext < align (cannot happen after _round_up)


def _query_vmem_capacity_bytes():
    try:
        info = pltpu.get_tpu_info()
        cap = getattr(info, "vmem_capacity_bytes", None)
        if cap:
            return int(cap)
    except Exception:
        pass
    # Conservative default (v7x physical VMEM) so the limit is safe everywhere.
    return 64 << 20


_VMEM_CAPACITY_BYTES = _query_vmem_capacity_bytes()


# ----------------------------------------------------------------------------
# Forward (activations are the only thing touched per call)
# ----------------------------------------------------------------------------
@functools.partial(jax.jit, static_argnames=("out_features", "compute_dtype"))
def _linear_fwd(x, weight_p, bias_p, *, out_features, compute_dtype):
    """x: (..., K); weight_p: (Kp, Np) prepared (cast+padded); bias_p: (1, Np) f32."""
    *lead, K = x.shape
    Kp, Np = weight_p.shape
    M = 1
    for d in lead:
        M *= d
    N = out_features
    out_dtype = x.dtype
    cb = jnp.dtype(compute_dtype).itemsize
    ob = jnp.dtype(out_dtype).itemsize

    # ---- pad/cast activations only (weight/bias were prepared once) --------
    align_m = 16 if compute_dtype == jnp.bfloat16 else 8
    Mp = _round_up(M, align_m)

    x2d = x.reshape(M, K)
    if x2d.dtype != compute_dtype:
        x2d = x2d.astype(compute_dtype)
    if (Mp, Kp) != (M, K):
        # Zero K-padding is numerically exact; padded M rows are sliced off.
        x2d = jnp.pad(x2d, ((0, Mp - M), (0, Kp - K)))

    # ---- tile selection -----------------------------------------------------
    tm = _pick_tile(Mp, cap=512, align=align_m, prefer=256)
    tn = _pick_tile(Np, cap=1024, align=128, prefer=256)
    tk = _pick_tile(Kp, cap=512, align=128, prefer=256)

    # Guarantee >= 2 parallel grid iterations (both v7x TensorCores get work;
    # negligible extra HBM traffic for decode-shaped calls).
    if (Mp // tm) == 1 and (Np // tn) == 1 and Np >= 256:
        tn = _pick_tile(Np, cap=max(128, tn // 2), align=128, prefer=256)

    grid = (Mp // tm, Np // tn, Kp // tk)

    # ---- VMEM budget (double-buffered inputs/outputs, f32 acc, padded bias) -
    est = (
        2 * (tm * tk + tk * tn) * cb      # x / w double buffers
        + 2 * 8 * tn * 4                  # bias (1,tn) -> sublane-padded (8,tn), f32
        + tm * tn * 4                     # f32 accumulator scratch
        + 2 * tm * tn * ob                # output double buffer
    )
    vmem_limit = int(min(max(2 * est + (8 << 20), 32 << 20),
                         int(_VMEM_CAPACITY_BYTES * 0.75)))

    cost = pl.CostEstimate(
        flops=2 * M * K * N,
        transcendentals=0,
        bytes_accessed=M * K * cb + Kp * Np * cb + M * N * ob + Np * 4,
    )

    out2d = pl.pallas_call(
        _matmul_bias_kernel,
        out_shape=jax.ShapeDtypeStruct((Mp, Np), out_dtype),
        grid_spec=pltpu.PrefetchScalarGridSpec(
            num_scalar_prefetch=0,
            grid=grid,
            in_specs=[
                pl.BlockSpec((tm, tk), lambda i, j, k: (i, k)),  # activations
                pl.BlockSpec((tk, tn), lambda i, j, k: (k, j)),  # weight stream
                pl.BlockSpec((1, tn), lambda i, j, k: (0, j)),   # bias row (f32)
            ],
            out_specs=pl.BlockSpec((tm, tn), lambda i, j, k: (i, j)),
            scratch_shapes=[pltpu.VMEM((tm, tn), jnp.float32)],
        ),
        compiler_params=pltpu.CompilerParams(
            dimension_semantics=("parallel", "parallel", "arbitrary"),
            vmem_limit_bytes=vmem_limit,
        ),
        cost_estimate=cost,
    )(x2d, weight_p, bias_p)

    return out2d[:M, :N].reshape(*lead, N)


# ----------------------------------------------------------------------------
# Module-style wrapper (mirrors IpexFastAllReduceLinear after port_data()).
# Weight/bias are cast + padded ONCE here, not per forward call.
# ----------------------------------------------------------------------------
class IpexFastAllReduceLinearTPU:
    def __init__(self, weight, bias=None, compute_dtype=jnp.bfloat16):
        # `weight` is already [in_features, out_features] (port_data transposed).
        K, N = weight.shape
        self.in_features = int(K)
        self.out_features = int(N)
        self.compute_dtype = compute_dtype
        self.mp_group = None  # TODO(synk): tensor-parallel all_reduce not implemented.

        Kp = _round_up(K, 128)
        Np = _round_up(N, 128)

        w = weight.astype(compute_dtype)
        if (Kp, Np) != (K, N):
            w = jnp.pad(w, ((0, Kp - K), (0, Np - N)))
        self.weight_p = w  # prepared once: cast + 128-aligned pad

        if bias is None:
            b = jnp.zeros((1, Np), dtype=jnp.float32)
        else:
            b = bias.reshape(1, N).astype(jnp.float32)
            if Np != N:
                b = jnp.pad(b, ((0, 0), (0, Np - N)))
        self.bias_p = b

    def __call__(self, x):
        return _linear_fwd(
            x, self.weight_p, self.bias_p,
            out_features=self.out_features,
            compute_dtype=self.compute_dtype,
        )


# ----------------------------------------------------------------------------
# Demo / self-check
# ----------------------------------------------------------------------------
if __name__ == "__main__":
    # Small shapes consistent with the module: (batch, seq, hidden) @ (hidden, out).
    # hidden/out chosen NOT multiples of 128 to exercise the padded-edge path.
    batch, seq, hidden, out_features = 2, 8, 300, 200

    key = jax.random.PRNGKey(0)
    kx, kw, kb = jax.random.split(key, 3)

    x = jax.random.normal(kx, (batch, seq, hidden), dtype=jnp.float32)
    # nn.Linear weight is (out, in); port_data() transposes it to (in, out).
    weight = jax.random.normal(kw, (hidden, out_features), dtype=jnp.float32) * 0.02
    bias = jax.random.normal(kb, (out_features,), dtype=jnp.float32) * 0.01

    layer = IpexFastAllReduceLinearTPU(weight, bias)
    out = layer(x)
    out = jax.block_until_ready(out)
    assert out.shape == (batch, seq, out_features)

    # Reference with the same bf16 MXU inputs + f32 accumulation.
    ref_bf16 = (
        jnp.matmul(
            x.astype(jnp.bfloat16),
            weight.astype(jnp.bfloat16),
            preferred_element_type=jnp.float32,
        )
        + bias
    )
    assert jnp.allclose(out, ref_bf16, atol=1e-2, rtol=1e-2), float(
        jnp.max(jnp.abs(out - ref_bf16))
    )

    # And stay close to the full-f32 reference (bf16 rounding tolerance only).
    ref_f32 = jnp.matmul(x, weight) + bias
    assert jnp.allclose(out, ref_f32, atol=5e-2, rtol=5e-2), float(
        jnp.max(jnp.abs(out - ref_f32))
    )

    print("KERNEL_OK")
</pallas_src>

<mosaic_0001>
module attributes {stable_mosaic.version = 11 : i64} {
  func.func @_matmul_bias_kernel(%arg0: i32, %arg1: i32, %arg2: i32, %arg3: memref<16x384xbf16, #tpu.memory_space<vmem>>, %arg4: memref<384x128xbf16, #tpu.memory_space<vmem>>, %arg5: memref<1x128xf32, #tpu.memory_space<vmem>>, %arg6: memref<16x128xf32, #tpu.memory_space<vmem>>, %arg7: memref<16x128xf32, #tpu.memory_space<vmem>>) attributes {dimension_semantics = [#tpu.dimension_semantics<parallel>, #tpu.dimension_semantics<parallel>, #tpu.dimension_semantics<arbitrary>], iteration_bounds = array<i64: 1, 2, 1>, scalar_prefetch = 0 : i64, scratch_operands = 1 : i64, tpu.core_type = #tpu.core_type<tc>, window_params = [{transform_indices = @transform_0, window_bounds = array<i64: 16, 384>}, {transform_indices = @transform_1, window_bounds = array<i64: 384, 128>}, {transform_indices = @transform_2, window_bounds = array<i64: 1, 128>}, {transform_indices = @transform_3, window_bounds = array<i64: 16, 128>}]} {
    %c0_i32 = arith.constant 0 : i32
    %0 = arith.cmpi eq, %arg2, %c0_i32 : i32
    %1 = arith.extui %0 : i1 to i32
    %c0_i32_0 = arith.constant 0 : i32
    %2 = arith.cmpi ne, %1, %c0_i32_0 : i32
    scf.if %2 {
      %c0_10 = arith.constant 0 : index
      %c0_11 = arith.constant 0 : index
      %12 = vector.load %arg5[%c0_10, %c0_11] : memref<1x128xf32, #tpu.memory_space<vmem>>, vector<1x128xf32>
      %13 = vector.shape_cast %12 : vector<1x128xf32> to vector<1x128xf32>
      %14 = vector.broadcast %13 : vector<1x128xf32> to vector<16x128xf32>
      %c0_12 = arith.constant 0 : index
      %c0_13 = arith.constant 0 : index
      %15 = vector.load %arg7[%c0_12, %c0_13] : memref<16x128xf32, #tpu.memory_space<vmem>>, vector<16x128xf32>
      tpu.vector_store %arg7[%c0_12, %c0_13], %14 {strides = array<i32>} : memref<16x128xf32, #tpu.memory_space<vmem>>, vector<16x128xf32>,
    } else {
    }
    %c0 = arith.constant 0 : index
    %c0_1 = arith.constant 0 : index
    %3 = vector.load %arg7[%c0, %c0_1] : memref<16x128xf32, #tpu.memory_space<vmem>>, vector<16x128xf32>
    %c0_2 = arith.constant 0 : index
    %c0_3 = arith.constant 0 : index
    %4 = vector.load %arg3[%c0_2, %c0_3] : memref<16x384xbf16, #tpu.memory_space<vmem>>, vector<16x384xbf16>
    %c0_4 = arith.constant 0 : index
    %c0_5 = arith.constant 0 : index
    %5 = vector.load %arg4[%c0_4, %c0_5] : memref<384x128xbf16, #tpu.memory_space<vmem>>, vector<384x128xbf16>
    %cst = arith.constant dense<0.000000e+00> : vector<16x128xf32>
    %6 = tpu.matmul %4, %5, %cst {dimension_numbers = #tpu.dot_dimension_numbers<[1], [0], [0], [1], [0, 0, 1, 1], [], []>} : vector<16x384xbf16>, vector<384x128xbf16>, vector<16x128xf32> -> vector<16x128xf32>
    %7 = arith.addf %3, %6 : vector<16x128xf32>
    %c0_6 = arith.constant 0 : index
    %c0_7 = arith.constant 0 : index
    %8 = vector.load %arg7[%c0_6, %c0_7] : memref<16x128xf32, #tpu.memory_space<vmem>>, vector<16x128xf32>
    tpu.vector_store %arg7[%c0_6, %c0_7], %7 {strides = array<i32>} : memref<16x128xf32, #tpu.memory_space<vmem>>, vector<16x128xf32>,
    %c0_i32_8 = arith.constant 0 : i32
    %9 = arith.cmpi eq, %arg2, %c0_i32_8 : i32
    %10 = arith.extui %9 : i1 to i32
    %c0_i32_9 = arith.constant 0 : i32
    %11 = arith.cmpi ne, %10, %c0_i32_9 : i32
    scf.if %11 {
      %c0_10 = arith.constant 0 : index
      %c0_11 = arith.constant 0 : index
      %12 = vector.load %arg7[%c0_10, %c0_11] : memref<16x128xf32, #tpu.memory_space<vmem>>, vector<16x128xf32>
      %c0_12 = arith.constant 0 : index
      %c0_13 = arith.constant 0 : index
      %13 = vector.load %arg6[%c0_12, %c0_13] : memref<16x128xf32, #tpu.memory_space<vmem>>, vector<16x128xf32>
      tpu.vector_store %arg6[%c0_12, %c0_13], %12 {strides = array<i32>} : memref<16x128xf32, #tpu.memory_space<vmem>>, vector<16x128xf32>,
    } else {
    }
    return
  }
  func.func @transform_0(%arg0: i32, %arg1: i32, %arg2: i32) -> (i32, i32) {
    %c0_i32 = arith.constant 0 : i32
    return %arg0, %arg2 : i32, i32
  }
  func.func @transform_1(%arg0: i32, %arg1: i32, %arg2: i32) -> (i32, i32) {
    %c0_i32 = arith.constant 0 : i32
    return %arg2, %arg1 : i32, i32
  }
  func.func @transform_2(%arg0: i32, %arg1: i32, %arg2: i32) -> (i32, i32) {
    %c0_i32 = arith.constant 0 : i32
    %c0_i32_0 = arith.constant 0 : i32
    return %c0_i32, %arg1 : i32, i32
  }
  func.func @transform_3(%arg0: i32, %arg1: i32, %arg2: i32) -> (i32, i32) {
    %c0_i32 = arith.constant 0 : i32
    return %arg0, %arg1 : i32, i32
  }
}

</mosaic_0001>

<llo_original>
// kernel: _linear_fwd.1
$region0: #{_linear_fwd.1}
  #allocation0 [shape = 'u32[]', space=smem, size = 0x4, offset = 0x4, fixed_abs, tag = 'smem constant byte address 0x4 - core index']
  #allocation1 [shape = 'u32[144,128]{1,0:T(1,128)}', space=vmem, size = 0x12000, scoped, tag = 'internal scratch']
  #allocation2 [shape = 'f32[16,128]{1,0:T(8,128)}', space=vmem, size = 0x2000, scoped, tag = 'scratch operand']
  %s0 = inlined_call_operand.vmem [shape: bf16[16,384], index: 0, kind: input, shape index: {}]
  %s1 = inlined_call_operand.hbm [shape: bf16[384,256], index: 1, kind: input, shape index: {}]
  %s2 = inlined_call_operand.vmem [shape: f32[1,256], index: 2, kind: input, shape index: {}]
  %s3 = inlined_call_operand.vmem [shape: f32[16,256], index: 3, kind: output, shape index: {}]
  %s4 = sld [smem:[#allocation0]]
  $region91: #{_linear_fwd.1} parent=0
    _
  %s6 = ssub.s32 1, %s4
  %s7 = scalar_select 0, %s6, %s4
  $region1: #{_linear_fwd.1} parent=0
    #allocation3 [shape = 'u8[196608]{0}', space=vmem, size = 0x30000, scoped, tag = 'input window, operand 1']
    #allocation4 [shape = 's32[2]{0}', space=sflag, size = 0x8, scoped, tag = 'scoped memory for _linear_fwd.1']
    #allocation5 [shape = 'u8[16384]{0}', space=vmem, size = 0x4000, scoped, tag = 'output window, operand 0']
    %8 = vsyncpa [#allocation4], 0
    %s9 = scalar_lea.sflag [#allocation4], 1
    %10 = vsyncpa %s9, 0
    loop: start=0, step=1, limit=4
    $region2: #{_linear_fwd.1} parent=1 // loop_pre_header
      _
    $region3: #{_linear_fwd.1} parent=1 // loop_header
      %s12 = sphi 0, %s16
      %p13 = scmp.ge.s32.totalorder %s12, 4
      %s19 = sphi 0, %s38
      %s20 = sphi 0, %s34
      %s21 = sphi 0, %s30
      %s22 = sphi 0, %s19
      %s23 = sphi 0, %s20
      %s24 = sphi 0, %s21
      %s25 = sphi 0, %s22
      %s26 = sphi 0, %s23
      %s27 = sphi 0, %s24
      %s43 = sphi 0, %s45
      %s46 = sphi 0, %s43
      %s47 = sphi 0, %s46
      %s63 = sphi 0, %s47
      %s71 = sphi 0, %s73
      %s74 = sphi 0, %s71
      %s75 = sphi 0, %s74
      %s91 = sphi 0, %s75
      %s97 = sphi 0, %s99
      %s100 = sphi 0, %s97
      %s101 = sphi 0, %s100
      %s117 = sphi 0, %s101
      %s125 = sphi 0, %s127
      %s128 = sphi 0, %s125
      %s129 = sphi 0, %s128
      %s145 = sphi 0, %s129
    $region4: #{_linear_fwd.1} parent=1 // loop_header_branch
      %15 = sbr.rel (%p13) target = $region8
    $region5: #{_linear_fwd.1} parent=1 // loop_body
      %s17 = ssub.s32 %s12, 1
      %s18 = ssub.s32 %s12, 2
      %s28 = sadd.s32 1, %s21
      %p29 = scmp.ge.s32.totalorder %s28, 1
      %s30 = scalar_select %p29, 0, %s28
      %s31 = sadd.s32 1, %s20
      %s32 = scalar_select %p29, %s31, %s20
      %p33 = scmp.ge.s32.totalorder %s32, 2
      %s34 = scalar_select %p33, 0, %s32
      %s35 = sadd.s32 1, %s19
      %s36 = scalar_select %p33, %s35, %s19
      %p37 = scmp.ge.s32.totalorder %s36, 1
      %s38 = scalar_select %p37, 0, %s36
      %s39 = ssub.s32 %s19, %s38
      %s40 = ssub.s32 %s21, %s30
      %s41 = sor.u32 %s39, %s40
      %p42 = scmp.eq.s32.totalorder %s41, 0
      %s44 = sadd.s32 %s43, 1
      %s45 = scalar_select %p42, %s43, %s44
      %p48 = pneg %p42
      %p49 = scmp.eq.s32.totalorder %s12, 1
      %p50 = por %p48, %p49
      %p51 = scmp.ne.s32.totalorder %s43, %s46
      %p52 = scmp.eq.s32.totalorder %s12, 0
      %p53 = por %p51, %p52
      %p54 = scmp.ne.s32.totalorder %s43, %s46
      %p55 = scmp.eq.s32.totalorder %s17, 1
      %p56 = por %p54, %p55
      %p57 = scmp.ne.s32.totalorder %s46, %s47
      %p58 = scmp.eq.s32.totalorder %s17, 0
      %p59 = por %p57, %p58
      %p60 = scmp.ne.s32.totalorder %s46, %s47
      %p61 = scmp.eq.s32.totalorder %s18, 1
      %p62 = por %p60, %p61
      %p64 = scmp.ne.s32.totalorder %s47, %s63
      %p65 = scmp.eq.s32.totalorder %s18, 0
      %p66 = por %p64, %p65
      %s67 = ssub.s32 %s21, %s30
      %s68 = ssub.s32 %s20, %s34
      %s69 = sor.u32 %s67, %s68
      %p70 = scmp.eq.s32.totalorder %s69, 0
      %s72 = sadd.s32 %s71, 1
      %s73 = scalar_select %p70, %s71, %s72
      %p76 = pneg %p70
      %p77 = scmp.eq.s32.totalorder %s12, 1
      %p78 = por %p76, %p77
      %p79 = scmp.ne.s32.totalorder %s71, %s74
      %p80 = scmp.eq.s32.totalorder %s12, 0
      %p81 = por %p79, %p80
      %p82 = scmp.ne.s32.totalorder %s71, %s74
      %p83 = scmp.eq.s32.totalorder %s17, 1
      %p84 = por %p82, %p83
      %p85 = scmp.ne.s32.totalorder %s74, %s75
      %p86 = scmp.eq.s32.totalorder %s17, 0
      %p87 = por %p85, %p86
      %p88 = scmp.ne.s32.totalorder %s74, %s75
      %p89 = scmp.eq.s32.totalorder %s18, 1
      %p90 = por %p88, %p89
      %p92 = scmp.ne.s32.totalorder %s75, %s91
      %p93 = scmp.eq.s32.totalorder %s18, 0
      %p94 = por %p92, %p93
      %s95 = ssub.s32 %s20, %s34
      %p96 = scmp.eq.s32.totalorder %s95, 0
      %s98 = sadd.s32 %s97, 1
      %s99 = scalar_select %p96, %s97, %s98
      %p102 = pneg %p96
      %p103 = scmp.eq.s32.totalorder %s12, 1
      %p104 = por %p102, %p103
      %p105 = scmp.ne.s32.totalorder %s97, %s100
      %p106 = scmp.eq.s32.totalorder %s12, 0
      %p107 = por %p105, %p106
      %p108 = scmp.ne.s32.totalorder %s97, %s100
      %p109 = scmp.eq.s32.totalorder %s17, 1
      %p110 = por %p108, %p109
      %p111 = scmp.ne.s32.totalorder %s100, %s101
      %p112 = scmp.eq.s32.totalorder %s17, 0
      %p113 = por %p111, %p112
      %p114 = scmp.ne.s32.totalorder %s100, %s101
      %p115 = scmp.eq.s32.totalorder %s18, 1
      %p116 = por %p114, %p115
      %p118 = scmp.ne.s32.totalorder %s101, %s117
      %p119 = scmp.eq.s32.totalorder %s18, 0
      %p120 = por %p118, %p119
      %s121 = ssub.s32 %s19, %s38
      %s122 = ssub.s32 %s20, %s34
      %s123 = sor.u32 %s121, %s122
      %p124 = scmp.eq.s32.totalorder %s123, 0
      %s126 = sadd.s32 %s125, 1
      %s127 = scalar_select %p124, %s125, %s126
      %p130 = pneg %p124
      %p131 = scmp.eq.s32.totalorder %s12, 1
      %p132 = por %p130, %p131
      %p133 = scmp.ne.s32.totalorder %s125, %s128
      %p134 = scmp.eq.s32.totalorder %s12, 0
      %p135 = por %p133, %p134
      %p136 = scmp.ne.s32.totalorder %s125, %s128
      %p137 = scmp.eq.s32.totalorder %s17, 1
      %p138 = por %p136, %p137
      %p139 = scmp.ne.s32.totalorder %s128, %s129
      %p140 = scmp.eq.s32.totalorder %s17, 0
      %p141 = por %p139, %p140
      %p142 = scmp.ne.s32.totalorder %s128, %s129
      %p143 = scmp.eq.s32.totalorder %s18, 1
      %p144 = por %p142, %p143
      %p146 = scmp.ne.s32.totalorder %s129, %s145
      %p147 = scmp.eq.s32.totalorder %s18, 0
      %p148 = por %p146, %p147
      %p149 = scmp.le.s32.totalorder 1, %s12
      %p150 = scmp.lt.s32.totalorder %s12, 3
      %p151 = pnand %p149, %p150
      %p152 = pneg %p151
      // Predicated region
      $region9: #{_linear_fwd.1} parent=5 // pred_check
        _
      $region10: #{_linear_fwd.1} parent=5 // pred_check_branch
        %154 = sbr.rel (%p151) target = $region12
      $region11: #{_linear_fwd.1} parent=5 // pred_region
        %s155 = ssub.s32 %s12, 1
        // Predicated region
        $region13: #{_linear_fwd.1} parent=11 // pred_check
          %p156 = pneg %p59
        $region14: #{_linear_fwd.1} parent=11 // pred_check_branch
          %158 = sbr.rel (%p156) target = $region16
        $region15: #{_linear_fwd.1} parent=11 // pred_region
          %s159 = smul.u32 2, %s22
          %s160 = smul.u32 3, %s24
          %p161 = scmp.lt.s32.totalorder %s159, 1
          %s162 = scalar_select %p161, %s159, 1
          %p163 = scmp.lt.s32.totalorder %s160, 2
          %s164 = scalar_select %p163, %s160, 2
          %s165 = smul.addr %s162, 3
          %s166 = sadd.s32 %s164, %s165
          %s167 = smul.addr %s166, 4
          %s168 = scalar_lea.vmem %s0, %s167
          %s169 = smul.u32 2, %s22
          %s170 = smul.u32 3, %s24
        $region16: #{_linear_fwd.1} parent=11 // pred_fallthru
          _
      $region12: #{_linear_fwd.1} parent=5 // pred_fallthru
        _
      %p171 = scmp.lt.s32.totalorder %s12, 2
      // Predicated region
      $region17: #{_linear_fwd.1} parent=5 // pred_check
        %p172 = pneg %p171
      $region18: #{_linear_fwd.1} parent=5 // pred_check_branch
        %174 = sbr.rel (%p172) target = $region20
      $region19: #{_linear_fwd.1} parent=5 // pred_region
        // Predicated region
        $region21: #{_linear_fwd.1} parent=19 // pred_check
          %p175 = pneg %p81
        $region22: #{_linear_fwd.1} parent=19 // pred_check_branch
          %177 = sbr.rel (%p175) target = $region24
        $region23: #{_linear_fwd.1} parent=19 // pred_region
          %s178 = sand.u32 %s71, 1
          %s179 = scalar_lea.sflag [#allocation4], %s178
          %s180 = sand.u32 %s71, 1
          %s181 = smul.addr %s180, 192
          %s182 = scalar_lea.vmem [#allocation3], %s181
          %s183 = smul.u32 48, %s21
          %s185 = ssub.s32 3072, 3072
          %186 = vsyncadd %s179, %s185
          %s187 = smul.addr %s183, 2
          %s188 = sadd.s32 %s20, %s187
          %s189 = smul.addr %s188, 64
          %s190 = scalar_lea.hbm %s1, %s189
          %s191 = sshll.u32 %s182, 4
          %s192 = int_to_ptr.vmem [resolvable:$true] %s191
          %197 = dma.hbm_to_vmem [thread:$0]  %s190, 3072, %s192, %s179, 128, 64, 4
        $region24: #{_linear_fwd.1} parent=19 // pred_fallthru
          _
        // Predicated region
        $region25: #{_linear_fwd.1} parent=19 // pred_check
          %p198 = pneg %p107
        $region26: #{_linear_fwd.1} parent=19 // pred_check_branch
          %200 = sbr.rel (%p198) target = $region28
        $region27: #{_linear_fwd.1} parent=19 // pred_region
          %p201 = scmp.lt.s32.totalorder %s20, 1
          %s202 = scalar_select %p201, %s20, 1
          %s203 = scalar_lea.vmem %s2, %s202
        $region28: #{_linear_fwd.1} parent=19 // pred_fallthru
          _
      $region20: #{_linear_fwd.1} parent=5 // pred_fallthru
        _
      %p204 = scmp.le.s32.totalorder 1, %s12
      %p205 = scmp.lt.s32.totalorder %s12, 3
      %p206 = pnand %p204, %p205
      %p207 = pneg %p206
      // Predicated region
      $region29: #{_linear_fwd.1} parent=5 // pred_check
        _
      $region30: #{_linear_fwd.1} parent=5 // pred_check_branch
        %209 = sbr.rel (%p206) target = $region32
      $region31: #{_linear_fwd.1} parent=5 // pred_region
        %s210 = ssub.s32 %s12, 1
        %s211 = sand.u32 %s74, 1
        %s212 = scalar_lea.sflag [#allocation4], %s211
        %s213 = sand.u32 %s74, 1
        %s214 = smul.addr %s213, 192
        %s215 = scalar_lea.vmem [#allocation3], %s214
        // Predicated region
        $region33: #{_linear_fwd.1} parent=31 // pred_check
          %p216 = pneg %p87
        $region34: #{_linear_fwd.1} parent=31 // pred_check_branch
          %218 = sbr.rel (%p216) target = $region36
        $region35: #{_linear_fwd.1} parent=31 // pred_region
          %219 = dma.done %s212, 3072
        $region36: #{_linear_fwd.1} parent=31 // pred_fallthru
          _
        %s220 = smul.u32 2, %s22
        %s221 = smul.u32 3, %s24
        %p222 = scmp.lt.s32.totalorder %s220, 1
        %s223 = scalar_select %p222, %s220, 1
        %p224 = scmp.lt.s32.totalorder %s221, 2
        %s225 = scalar_select %p224, %s221, 2
        %s226 = smul.addr %s223, 3
        %s227 = sadd.s32 %s225, %s226
        %s228 = smul.addr %s227, 4
        %s229 = scalar_lea.vmem %s0, %s228
        %p230 = pneg %p59
        %p231 = pneg %p56
        %s232 = sand.u32 %s74, 1
        %s233 = scalar_lea.sflag [#allocation4], %s232
        %s234 = sand.u32 %s74, 1
        %s235 = smul.addr %s234, 192
        %s236 = scalar_lea.vmem [#allocation3], %s235
        %p237 = pneg %p87
        %p238 = pneg %p84
        %p239 = scmp.lt.s32.totalorder %s23, 1
        %s240 = scalar_select %p239, %s23, 1
        %s241 = scalar_lea.vmem %s2, %s240
        %p242 = pneg %p113
        %p243 = pneg %p110
        %p244 = pneg %p141
        %p245 = pneg %p138
        %s246 = sand.u32 %s128, 1
        %s247 = sand.u32 %s128, 1
        %s248 = smul.addr %s247, 16
        %s249 = scalar_lea.vmem [#allocation5], %s248
        %s250 = smul.u32 2, %s22
        %s251 = smul.u32 3, %s24
        %p252 = scmp.lt.s32.totalorder %s250, 1
        %s253 = scalar_select %p252, %s250, 1
        %p254 = scmp.lt.s32.totalorder %s251, 2
        %s255 = scalar_select %p254, %s251, 2
        %s256 = smul.addr %s253, 3
        %s257 = sadd.s32 %s255, %s256
        %s258 = smul.addr %s257, 4
        %s259 = scalar_lea.vmem %s0, %s258
        %s260 = smul.u32 2, %s22
        %s261 = smul.u32 3, %s24
        %s262 = smul.u32 48, %s24
        %p263 = scmp.lt.s32.totalorder %s23, 1
        %s264 = scalar_select %p263, %s23, 1
        %s265 = scalar_lea.vmem %s2, %s264
        %s266 = smul.u32 2, %s22
        %p268 = scmp.eq.s32.totalorder %s24, 0
        // Predicated region
        $region37: #{_linear_fwd.1} parent=31 // pred_check
          %p269 = pneg %p268
        $region38: #{_linear_fwd.1} parent=31 // pred_check_branch
          %271 = sbr.rel (%p269) target = $region40
        $region39: #{_linear_fwd.1} parent=31 // pred_region
          %v272 = vld [vmem:[%s265] sm:$0x1]
          %v274 = vlaneseq
          %v275 = vshrl.u32 %v274, 7
          %v276 = vsub.s32 0, %v275
          %v277 = vrot.slane %v272, %v276
          %279 = vst [vmem:[#allocation2] sm:$0xff] %v277
          %280 = vst [vmem:[#allocation2 + $0x8] sm:$0xff] %v277
        $region40: #{_linear_fwd.1} parent=31 // pred_fallthru
          _
        %v281 = vld [vmem:[#allocation2] sm:$0xff]
        %v282 = vld [vmem:[#allocation2 + $0x8] sm:$0xff]
        %v283 = vld [vmem:[%s259] sm:$0xff]
        %v284 = vld [vmem:[%s259 + $0x8] sm:$0xf]
        %v285 = vld [vmem:[%s259 + $0xc] sm:$0xff]
        %v286 = vld [vmem:[%s259 + $0x14] sm:$0xf]
        %v287 = vld [vmem:[%s215] sm:$0xf]
        %v288 = vld [vmem:[%s215 + $0x4] sm:$0xf]
        %v289 = vld [vmem:[%s215 + $0x8] sm:$0xf]
        %v290 = vld [vmem:[%s215 + $0xc] sm:$0xf]
        %v291 = vld [vmem:[%s215 + $0x10] sm:$0xf]
        %v292 = vld [vmem:[%s215 + $0x14] sm:$0xf]
        %v293 = vld [vmem:[%s215 + $0x18] sm:$0xf]
        %v294 = vld [vmem:[%s215 + $0x1c] sm:$0xf]
        %v295 = vld [vmem:[%s215 + $0x20] sm:$0xf]
        %v296 = vld [vmem:[%s215 + $0x24] sm:$0xf]
        %v297 = vld [vmem:[%s215 + $0x28] sm:$0xf]
        %v298 = vld [vmem:[%s215 + $0x2c] sm:$0xf]
        %v299 = vld [vmem:[%s215 + $0x30] sm:$0xf]
        %v300 = vld [vmem:[%s215 + $0x34] sm:$0xf]
        %v301 = vld [vmem:[%s215 + $0x38] sm:$0xf]
        %v302 = vld [vmem:[%s215 + $0x3c] sm:$0xf]
        %v303 = vld [vmem:[%s215 + $0x40] sm:$0xf]
        %v304 = vld [vmem:[%s215 + $0x44] sm:$0xf]
        %v305 = vld [vmem:[%s215 + $0x48] sm:$0xf]
        %v306 = vld [vmem:[%s215 + $0x4c] sm:$0xf]
        %v307 = vld [vmem:[%s215 + $0x50] sm:$0xf]
        %v308 = vld [vmem:[%s215 + $0x54] sm:$0xf]
        %v309 = vld [vmem:[%s215 + $0x58] sm:$0xf]
        %v310 = vld [vmem:[%s215 + $0x5c] sm:$0xf]
        %v311 = vld [vmem:[%s215 + $0x60] sm:$0xf]
        %v312 = vld [vmem:[%s215 + $0x64] sm:$0xf]
        %v313 = vld [vmem:[%s215 + $0x68] sm:$0xf]
        %v314 = vld [vmem:[%s215 + $0x6c] sm:$0xf]
        %v315 = vld [vmem:[%s215 + $0x70] sm:$0xf]
        %v316 = vld [vmem:[%s215 + $0x74] sm:$0xf]
        %v317 = vld [vmem:[%s215 + $0x78] sm:$0xf]
        %v318 = vld [vmem:[%s215 + $0x7c] sm:$0xf]
        %v319 = vld [vmem:[%s215 + $0x80] sm:$0xf]
        %v320 = vld [vmem:[%s215 + $0x84] sm:$0xf]
        %v321 = vld [vmem:[%s215 + $0x88] sm:$0xf]
        %v322 = vld [vmem:[%s215 + $0x8c] sm:$0xf]
        %v323 = vld [vmem:[%s215 + $0x90] sm:$0xf]
        %v324 = vld [vmem:[%s215 + $0x94] sm:$0xf]
        %v325 = vld [vmem:[%s215 + $0x98] sm:$0xf]
        %v326 = vld [vmem:[%s215 + $0x9c] sm:$0xf]
        %v327 = vld [vmem:[%s215 + $0xa0] sm:$0xf]
        %v328 = vld [vmem:[%s215 + $0xa4] sm:$0xf]
        %v329 = vld [vmem:[%s215 + $0xa8] sm:$0xf]
        %v330 = vld [vmem:[%s215 + $0xac] sm:$0xf]
        %v331 = vld [vmem:[%s215 + $0xb0] sm:$0xf]
        %v332 = vld [vmem:[%s215 + $0xb4] sm:$0xf]
        %v333 = vld [vmem:[%s215 + $0xb8] sm:$0xf]
        %v334 = vld [vmem:[%s215 + $0xbc] sm:$0xf]
        %v339 = vunpack.c.l.b16 %v283
        %v340 = vunpack.c.h.b16 %v283
        %v341 = vunpack.c.l.b16 %v284
        %v342 = vunpack.c.l.b16 %v285
        %v343 = vunpack.c.h.b16 %v285
        %v344 = vunpack.c.l.b16 %v286
        %v345 = vpack.c.b16 %v342, %v339
        %v346 = vpack.c.b16 %v343, %v340
        %v347 = vpack.c.b16 %v344, %v341
        %v399 = vunpack.c.l.b16 %v287
        %v400 = vunpack.c.l.b16 %v288
        %v401 = vunpack.c.l.b16 %v289
        %v402 = vunpack.c.l.b16 %v290
        %v403 = vunpack.c.l.b16 %v291
        %v404 = vunpack.c.l.b16 %v292
        %v405 = vunpack.c.l.b16 %v293
        %v406 = vunpack.c.l.b16 %v294
        %v407 = vunpack.c.l.b16 %v295
        %v408 = vunpack.c.l.b16 %v296
        %v409 = vunpack.c.l.b16 %v297
        %v410 = vunpack.c.l.b16 %v298
        %v411 = vunpack.c.l.b16 %v299
        %v412 = vunpack.c.l.b16 %v300
        %v413 = vunpack.c.l.b16 %v301
        %v414 = vunpack.c.l.b16 %v302
        %v415 = vunpack.c.l.b16 %v303
        %v416 = vunpack.c.l.b16 %v304
        %v417 = vunpack.c.l.b16 %v305
        %v418 = vunpack.c.l.b16 %v306
        %v419 = vunpack.c.l.b16 %v307
        %v420 = vunpack.c.l.b16 %v308
        %v421 = vunpack.c.l.b16 %v309
        %v422 = vunpack.c.l.b16 %v310
        %v423 = vunpack.c.l.b16 %v311
        %v424 = vunpack.c.l.b16 %v312
        %v425 = vunpack.c.l.b16 %v313
        %v426 = vunpack.c.l.b16 %v314
        %v427 = vunpack.c.l.b16 %v315
        %v428 = vunpack.c.l.b16 %v316
        %v429 = vunpack.c.l.b16 %v317
        %v430 = vunpack.c.l.b16 %v318
        %v431 = vunpack.c.l.b16 %v319
        %v432 = vunpack.c.l.b16 %v320
        %v433 = vunpack.c.l.b16 %v321
        %v434 = vunpack.c.l.b16 %v322
        %v435 = vunpack.c.l.b16 %v323
        %v436 = vunpack.c.l.b16 %v324
        %v437 = vunpack.c.l.b16 %v325
        %v438 = vunpack.c.l.b16 %v326
        %v439 = vunpack.c.l.b16 %v327
        %v440 = vunpack.c.l.b16 %v328
        %v441 = vunpack.c.l.b16 %v329
        %v442 = vunpack.c.l.b16 %v330
        %v443 = vunpack.c.l.b16 %v331
        %v444 = vunpack.c.l.b16 %v332
        %v445 = vunpack.c.l.b16 %v333
        %v446 = vunpack.c.l.b16 %v334
        %v447 = vpack.c.b16 %v400, %v399
        %v448 = vpack.c.b16 %v402, %v401
        %v449 = vpack.c.b16 %v404, %v403
        %v450 = vpack.c.b16 %v406, %v405
        %v451 = vpack.c.b16 %v408, %v407
        %v452 = vpack.c.b16 %v410, %v409
        %v453 = vpack.c.b16 %v412, %v411
        %v454 = vpack.c.b16 %v414, %v413
        %v455 = vpack.c.b16 %v416, %v415
        %v456 = vpack.c.b16 %v418, %v417
        %v457 = vpack.c.b16 %v420, %v419
        %v458 = vpack.c.b16 %v422, %v421
        %v459 = vpack.c.b16 %v424, %v423
        %v460 = vpack.c.b16 %v426, %v425
        %v461 = vpack.c.b16 %v428, %v427
        %v462 = vpack.c.b16 %v430, %v429
        %v463 = vpack.c.b16 %v432, %v431
        %v464 = vpack.c.b16 %v434, %v433
        %v465 = vpack.c.b16 %v436, %v435
        %v466 = vpack.c.b16 %v438, %v437
        %v467 = vpack.c.b16 %v440, %v439
        %v468 = vpack.c.b16 %v442, %v441
        %v469 = vpack.c.b16 %v444, %v443
        %v470 = vpack.c.b16 %v446, %v445
        %495 = vmatprep.subr.bf16.mxu0 0
        %496 = vmatpush1.bf16.msra.mxu0 %v447
        %497 = vmatprep.subr.bf16.mxu0 0
        %498 = vmatpush1.bf16.msra.mxu0 %v448
        %499 = vmatprep.subr.bf16.mxu0 0
        %500 = vmatpush1.bf16.msra.mxu0 %v449
        %501 = vmatprep.subr.bf16.mxu0 0
        %502 = vmatpush1.bf16.msra.mxu0 %v450
        %503 = vmatprep.subr.bf16.mxu0 0
        %504 = vmatpush1.bf16.msra.mxu0 %v451
        %505 = vmatprep.subr.bf16.mxu0 0
        %506 = vmatpush1.bf16.msra.mxu0 %v452
        %507 = vmatprep.subr.bf16.mxu0 0
        %508 = vmatpush1.bf16.msra.mxu0 %v453
        %509 = vmatprep.subr.bf16.mxu0 0
        %510 = vmatpush1.bf16.msra.mxu0 %v454
        %511 = vmatprep.subr.bf16.mxu0 0
        %512 = vmatpush1.bf16.msra.mxu0 %v455
        %513 = vmatprep.subr.bf16.mxu0 0
        %514 = vmatpush1.bf16.msra.mxu0 %v456
        %515 = vmatprep.subr.bf16.mxu0 0
        %516 = vmatpush1.bf16.msra.mxu0 %v457
        %517 = vmatprep.subr.bf16.mxu0 0
        %518 = vmatpush1.bf16.msra.mxu0 %v458
        %519 = vmatprep.subr.bf16.mxu0 0
        %520 = vmatpush1.bf16.msra.mxu0 %v459
        %521 = vmatprep.subr.bf16.mxu0 0
        %522 = vmatpush1.bf16.msra.mxu0 %v460
        %523 = vmatprep.subr.bf16.mxu0 0
        %524 = vmatpush1.bf16.msra.mxu0 %v461
        %525 = vmatprep.subr.bf16.mxu0 0
        %526 = vmatpush1.bf16.msra.mxu0 %v462
        %527 = vmatprep.mubr.bf16.mxu0 %v346
        %528 = vmatmul.mubr.bf16.gmra.mrb[0].mxu0 %v345
        %v529 = vpop.f32.mrb[0].mxu0
        %v530 = vadd.f32 0.0, %v529
        %v531 = vpop.f32.mrb[0].mxu0
        %v532 = vpop.f32.mrb[0].mxu0
        %v533 = vadd.f32 0.0, %v532
        %v534 = vpop.f32.mrb[0].mxu0
        %535 = vdwg.mxu0
        %536 = vmatprep.subr.bf16.mxu0 0
        %537 = vmatpush1.bf16.msra.mxu0 %v463
        %538 = vmatprep.subr.bf16.mxu0 0
        %539 = vmatpush1.bf16.msra.mxu0 %v464
        %540 = vmatprep.subr.bf16.mxu0 0
        %541 = vmatpush1.bf16.msra.mxu0 %v465
        %542 = vmatprep.subr.bf16.mxu0 0
        %543 = vmatpush1.bf16.msra.mxu0 %v466
        %544 = vmatprep.subr.bf16.mxu0 0
        %545 = vmatpush1.bf16.msra.mxu0 %v467
        %546 = vmatprep.subr.bf16.mxu0 0
        %547 = vmatpush1.bf16.msra.mxu0 %v468
        %548 = vmatprep.subr.bf16.mxu0 0
        %549 = vmatpush1.bf16.msra.mxu0 %v469
        %550 = vmatprep.subr.bf16.mxu0 0
        %551 = vmatpush1.bf16.msra.mxu0 %v470
        %552 = vmatprep.subr.bf16.mxu0 0
        %553 = vmatpush1.bf16.msra.mxu0 0
        %554 = vmatprep.subr.bf16.mxu0 0
        %555 = vmatpush1.bf16.msra.mxu0 0
        %556 = vmatprep.subr.bf16.mxu0 0
        %557 = vmatpush1.bf16.msra.mxu0 0
        %558 = vmatprep.subr.bf16.mxu0 0
        %559 = vmatpush1.bf16.msra.mxu0 0
        %560 = vmatprep.subr.bf16.mxu0 0
        %561 = vmatpush1.bf16.msra.mxu0 0
        %562 = vmatprep.subr.bf16.mxu0 0
        %563 = vmatpush1.bf16.msra.mxu0 0
        %564 = vmatprep.subr.bf16.mxu0 0
        %565 = vmatpush1.bf16.msra.mxu0 0
        %566 = vmatprep.subr.bf16.mxu0 0
        %567 = vmatpush1.bf16.msra.mxu0 0
        %568 = vmatprep.mubr.bf16.mxu0 0
        %569 = vmatmul.mubr.bf16.gmra.mrb[0].mxu0 %v347
        %v570 = vpop.f32.mrb[0].mxu0
        %v571 = vadd.f32 %v530, %v570
        %v572 = vpop.f32.mrb[0].mxu0
        %v573 = vpop.f32.mrb[0].mxu0
        %v574 = vadd.f32 %v533, %v573
        %v575 = vpop.f32.mrb[0].mxu0
        %576 = vdwg.mxu0
        %v577 = vadd.f32 %v281, %v571
        %v578 = vadd.f32 %v282, %v574
        %579 = vst [vmem:[#allocation2] sm:$0xff] %v577
        %580 = vst [vmem:[#allocation2 + $0x8] sm:$0xff] %v578
        // Predicated region
        $region41: #{_linear_fwd.1} parent=31 // pred_check
          %p581 = pneg %p268
        $region42: #{_linear_fwd.1} parent=31 // pred_check_branch
          %583 = sbr.rel (%p581) target = $region44
        $region43: #{_linear_fwd.1} parent=31 // pred_region
          %v584 = vld [vmem:[#allocation2] sm:$0xff]
          %v585 = vld [vmem:[#allocation2 + $0x8] sm:$0xff]
          %586 = vst [vmem:[%s249] sm:$0xff] %v584
          %587 = vst [vmem:[%s249 + $0x8] sm:$0xff] %v585
        $region44: #{_linear_fwd.1} parent=31 // pred_fallthru
          _
        %s588 = sand.u32 %s128, 1
        %s589 = sand.u32 %s128, 1
        %s590 = smul.addr %s589, 16
        %s591 = scalar_lea.vmem [#allocation5], %s590
        // Predicated region
        $region45: #{_linear_fwd.1} parent=31 // pred_check
          %p592 = pneg %p138
        $region46: #{_linear_fwd.1} parent=31 // pred_check_branch
          %594 = sbr.rel (%p592) target = $region48
        $region47: #{_linear_fwd.1} parent=31 // pred_region
          %s595 = smul.u32 2, %s22
          %s596 = smul.addr %s595, 2
          %s597 = sadd.s32 %s23, %s596
          %s598 = smul.addr %s597, 8
          %s599 = scalar_lea.vmem %s3, %s598
          // Predicated region
          $region49: #{_linear_fwd.1} parent=47 // pred_check
            _
          $region50: #{_linear_fwd.1} parent=47 // pred_check_branch
            %601 = sbr.rel (0) target = $region52
          $region51: #{_linear_fwd.1} parent=47 // pred_region
            // Predicated region
            $region53: #{_linear_fwd.1} parent=51 // pred_check
              _
            $region54: #{_linear_fwd.1} parent=51 // pred_check_branch
              %603 = sbr.rel (0) target = $region56
            $region55: #{_linear_fwd.1} parent=51 // pred_region
              // Predicated region
              $region68: #{_linear_fwd.1} parent=55 // pred_check
                _
              $region69: #{_linear_fwd.1} parent=55 // pred_check_branch
                %620 = sbr.rel (0) target = $region71
              $region70: #{_linear_fwd.1} parent=55 // pred_region
                loop: start=0, step=1, limit=1
                $region72: #{_linear_fwd.1} parent=70 // loop_pre_header
                  _
                $region73: #{_linear_fwd.1} parent=70 // loop_header
                  %s622 = sphi 0, %s626
                  %p623 = scmp.ge.s32.totalorder %s622, 1
                  %s627 = sphi %s591, %s591
                  %s628 = sphi %s599, %s599
                $region74: #{_linear_fwd.1} parent=70 // loop_header_branch
                  %625 = sbr.rel (%p623) target = $region78
                $region75: #{_linear_fwd.1} parent=70 // loop_body
                  %v629 = vld [vmem:[%s627] sm:$0xff]
                  %630 = vst [vmem:[%s628] sm:$0xff] %v629
                  %v631 = vld [vmem:[%s627 + $0x8] sm:$0xff]
                  %632 = vst [vmem:[%s628 + $0x10] sm:$0xff] %v631
                $region76: #{_linear_fwd.1} parent=70 // loop_footer
                  %s626 = sadd.s32 1, %s622
                $region77: #{_linear_fwd.1} parent=70 // loop_footer_branch
                  %621 = sbr.rel target = $region73
                $region78: #{_linear_fwd.1} parent=70 // loop_exit
                  _
              $region71: #{_linear_fwd.1} parent=55 // pred_fallthru
                _
              // Predicated region
              $region79: #{_linear_fwd.1} parent=55 // pred_check
                _
              $region80: #{_linear_fwd.1} parent=55 // pred_check_branch
                %634 = sbr.rel target = $region82
              $region81: #{_linear_fwd.1} parent=55 // pred_region
                _
              $region82: #{_linear_fwd.1} parent=55 // pred_fallthru
                _
            $region56: #{_linear_fwd.1} parent=51 // pred_fallthru
              _
            // Predicated region
            $region57: #{_linear_fwd.1} parent=51 // pred_check
              _
            $region58: #{_linear_fwd.1} parent=51 // pred_check_branch
              %605 = sbr.rel target = $region60
            $region59: #{_linear_fwd.1} parent=51 // pred_region
              loop: start=0, step=1, limit=1
              $region61: #{_linear_fwd.1} parent=59 // loop_pre_header
                _
              $region62: #{_linear_fwd.1} parent=59 // loop_header
                %s608 = sphi 0, %s612
                %p609 = scmp.ge.s32.totalorder %s608, 1
                %s613 = sphi %s591, %s591
                %s614 = sphi %s599, %s599
              $region63: #{_linear_fwd.1} parent=59 // loop_header_branch
                %611 = sbr.rel (%p609) target = $region67
              $region64: #{_linear_fwd.1} parent=59 // loop_body
                %v615 = vld [vmem:[%s613] sm:$0xff]
                %616 = vst [vmem:[%s614] sm:$0xff] %v615
                %v617 = vld [vmem:[%s613 + $0x8] sm:$0xff]
                %618 = vst [vmem:[%s614 + $0x10] sm:$0xff] %v617
              $region65: #{_linear_fwd.1} parent=59 // loop_footer
                %s612 = sadd.s32 1, %s608
              $region66: #{_linear_fwd.1} parent=59 // loop_footer_branch
                %607 = sbr.rel target = $region62
              $region67: #{_linear_fwd.1} parent=59 // loop_exit
                _
            $region60: #{_linear_fwd.1} parent=51 // pred_fallthru
              _
          $region52: #{_linear_fwd.1} parent=47 // pred_fallthru
            _
          %635 = vnop
        $region48: #{_linear_fwd.1} parent=31 // pred_fallthru
          _
      $region32: #{_linear_fwd.1} parent=5 // pred_fallthru
        _
      %p636 = scmp.le.s32.totalorder 2, %s12
      // Predicated region
      $region83: #{_linear_fwd.1} parent=5 // pred_check
        %p637 = pneg %p636
      $region84: #{_linear_fwd.1} parent=5 // pred_check_branch
        %639 = sbr.rel (%p637) target = $region86
      $region85: #{_linear_fwd.1} parent=5 // pred_region
        %s640 = ssub.s32 %s12, 2
        // Predicated region
        $region87: #{_linear_fwd.1} parent=85 // pred_check
          %p641 = pneg %p144
        $region88: #{_linear_fwd.1} parent=85 // pred_check_branch
          %643 = sbr.rel (%p641) target = $region90
        $region89: #{_linear_fwd.1} parent=85 // pred_region
          %s644 = sand.u32 %s129, 1
          %s645 = sand.u32 %s129, 1
          %s646 = smul.addr %s645, 16
          %s647 = scalar_lea.vmem [#allocation5], %s646
        $region90: #{_linear_fwd.1} parent=85 // pred_fallthru
          _
      $region86: #{_linear_fwd.1} parent=5 // pred_fallthru
        _
    $region6: #{_linear_fwd.1} parent=1 // loop_footer
      %s16 = sadd.s32 1, %s12
    $region7: #{_linear_fwd.1} parent=1 // loop_footer_branch
      %11 = sbr.rel target = $region3
    $region8: #{_linear_fwd.1} parent=1 // loop_exit
      _
    %648 = vsyncpa [#allocation4], 1
    %s649 = scalar_lea.sflag [#allocation4], 1
    %650 = vsyncpa %s649, 1

</llo_original>
